<compile_context>
chip_gen: v5e
topology: v5e:2x2
jax: 0.10.0
libtpu: 0.0.40
codegen_flags: <defaults>
</compile_context>

<pallas_src>
import jax
import jax.numpy as jnp
import numpy as np
from jax.experimental import pallas as pl
from jax.experimental.pallas import tpu as pltpu


def _fused_block_kernel(patches_ref, w1_ref, w2_ref, b2_ref, alpha_ref, o_ref):
    """One (image, spatial-tile) per grid step.

    patches_ref : (1, k*k*Cin, T)   im2col columns for this tile (VMEM)
    w1_ref      : (Ctmp, k*k*Cin)   flattened expand-conv weight
    w2_ref      : (Cout, Ctmp)      squeeze 1x1 conv weight
    b2_ref      : (Cout, 1)         squeeze conv bias (broadcast over lanes)
    alpha_ref   : (1,)              PReLU slope (SMEM scalar)
    o_ref       : (1, Cout, T)      output tile (NCHW, flattened spatial)
    """
    cols = patches_ref[0]                                          # (kkCin, T)

    # --- expand conv: single MXU push with K = k*k*Cin ----------------------
    t = jnp.dot(w1_ref[...], cols, preferred_element_type=jnp.float32)

    # --- squeeze 1x1 conv + bias (kept separate: non-collapsed semantics) ---
    y = jnp.dot(w2_ref[...], t, preferred_element_type=jnp.float32)
    y = y + b2_ref[...]                                            # (Cout, T)

    # --- PReLU (single shared slope, torch default) -------------------------
    alpha = alpha_ref[0]
    y = jnp.where(y >= 0, y, alpha * y)

    o_ref[0] = y.astype(o_ref.dtype)


def collapsible_linear_block_nchw(x_nchw, w1_torch, w2_torch, b2, alpha, *,
                                  k, lane_tile=None, compute_dtype=None):
    """Same I/O convention as the PyTorch module (NCHW in / NCHW out).

    w1_torch : (Ctmp, Cin, k, k)   conv_expand.weight (no bias)
    w2_torch : (Cout, Ctmp, 1, 1)  conv_squeeze.weight
    b2       : (Cout,)             conv_squeeze.bias
    alpha    : (1,)                PReLU slope
    """
    N, Cin, H, W = x_nchw.shape
    Ctmp = w1_torch.shape[0]
    Cout = w2_torch.shape[0]
    assert k % 2 == 1, "symmetric SAME padding only matches odd kernel sizes"
    kkCin = Cin * k * k
    HW = H * W

    # im2col fused with SAME padding.  Output feature order is
    # (c, dy, dx) channel-major, matching torch's (Cout, Cin, kH, kW) weight
    # flattening, so a plain reshape of the torch weight lines up.
    patches = jax.lax.conv_general_dilated_patches(
        x_nchw, filter_shape=(k, k), window_strides=(1, 1), padding='SAME',
        dimension_numbers=('NCHW', 'OIHW', 'NCHW'))           # (N, kkCin, H, W)
    patches = patches.reshape(N, kkCin, HW)

    w1_flat = w1_torch.reshape(Ctmp, kkCin)                   # (Ctmp, kkCin)
    w2_mat = w2_torch[:, :, 0, 0]                             # (Cout, Ctmp)
    b2_col = b2.reshape(Cout, 1).astype(jnp.float32)
    alpha = alpha.astype(jnp.float32)

    if compute_dtype is not None:   # e.g. jnp.bfloat16; accumulation stays f32
        patches = patches.astype(compute_dtype)
        w1_flat = w1_flat.astype(compute_dtype)
        w2_mat = w2_mat.astype(compute_dtype)

    # Spatial (lane-axis) tiling: full image per step when small, 2048-lane
    # tiles otherwise (keeps double-buffered VMEM tiny even on v7x's 64 MiB).
    if lane_tile is None:
        lane_tile = 2048 if (HW > 2048 and HW % 2048 == 0) else HW
    assert HW % lane_tile == 0
    assert lane_tile == HW or lane_tile % 128 == 0

    grid = (N, HW // lane_tile)

    out = pl.pallas_call(
        _fused_block_kernel,
        out_shape=jax.ShapeDtypeStruct((N, Cout, HW), x_nchw.dtype),
        grid_spec=pltpu.PrefetchScalarGridSpec(
            num_scalar_prefetch=0,
            grid=grid,
            in_specs=[
                pl.BlockSpec((1, kkCin, lane_tile), lambda n, s: (n, 0, s)),
                pl.BlockSpec((Ctmp, kkCin), lambda n, s: (0, 0)),
                pl.BlockSpec((Cout, Ctmp), lambda n, s: (0, 0)),
                pl.BlockSpec((Cout, 1), lambda n, s: (0, 0)),
                pl.BlockSpec(memory_space=pltpu.MemorySpace.SMEM),
            ],
            out_specs=pl.BlockSpec((1, Cout, lane_tile), lambda n, s: (n, 0, s)),
        ),
        compiler_params=pltpu.CompilerParams(
            dimension_semantics=("parallel", "parallel")),
    )(patches, w1_flat, w2_mat, b2_col, alpha)

    return out.reshape(N, Cout, H, W)


def _reference_nchw(x_nchw, w1_torch, w2_torch, b2, alpha):
    """Pure-JAX (XLA conv) reference matching the PyTorch forward."""
    y = jax.lax.conv_general_dilated(
        x_nchw, w1_torch, (1, 1), 'SAME',
        dimension_numbers=('NCHW', 'OIHW', 'NCHW'))
    y = jax.lax.conv_general_dilated(
        y, w2_torch, (1, 1), 'SAME',
        dimension_numbers=('NCHW', 'OIHW', 'NCHW')) + b2[None, :, None, None]
    return jnp.where(y >= 0, y, alpha[0] * y)


if __name__ == "__main__":
    # module config: CollapsibleLinearBlock(in=4, out=4, tmp=8, kernel_size=3,
    #                                       activation='prelu')
    N, Cin, H, W = 2, 4, 16, 16
    Ctmp, Cout, K = 8, 4, 3

    key = jax.random.PRNGKey(0)
    k_x, k_w1, k_w2, k_b2 = jax.random.split(key, 4)

    x = jax.random.normal(k_x, (N, Cin, H, W), dtype=jnp.float32)        # NCHW
    w1_torch = jax.random.normal(k_w1, (Ctmp, Cin, K, K), jnp.float32) * 0.1
    w2_torch = jax.random.normal(k_w2, (Cout, Ctmp, 1, 1), jnp.float32) * 0.1
    b2 = jax.random.normal(k_b2, (Cout,), jnp.float32) * 0.1
    alpha = jnp.array([0.25], dtype=jnp.float32)  # nn.PReLU() default init

    out = collapsible_linear_block_nchw(x, w1_torch, w2_torch, b2, alpha, k=K)
    out = jax.block_until_ready(out)

    ref = jax.block_until_ready(_reference_nchw(x, w1_torch, w2_torch, b2, alpha))
    np.testing.assert_allclose(np.asarray(out), np.asarray(ref),
                               rtol=1e-5, atol=2e-5)

    print("KERNEL_OK")
</pallas_src>

<mosaic_0001>
module attributes {stable_mosaic.version = 11 : i64} {
  func.func @_fused_block_kernel(%arg0: i32, %arg1: i32, %arg2: memref<1x36x256xf32, #tpu.memory_space<vmem>>, %arg3: memref<8x36xf32, #tpu.memory_space<vmem>>, %arg4: memref<4x8xf32, #tpu.memory_space<vmem>>, %arg5: memref<4x1xf32, #tpu.memory_space<vmem>>, %arg6: memref<1xf32, #tpu.memory_space<smem>>, %arg7: memref<1x4x256xf32, #tpu.memory_space<vmem>>) attributes {dimension_semantics = [#tpu.dimension_semantics<parallel>, #tpu.dimension_semantics<parallel>], iteration_bounds = array<i64: 2, 1>, scalar_prefetch = 0 : i64, scratch_operands = 0 : i64, tpu.core_type = #tpu.core_type<tc>, window_params = [{transform_indices = @transform_0, window_bounds = array<i64: 1, 36, 256>}, {pipeline_mode = #tpu.pipeline_mode<synchronous>, transform_indices = @transform_1, window_bounds = array<i64: 8, 36>}, {pipeline_mode = #tpu.pipeline_mode<synchronous>, transform_indices = @transform_2, window_bounds = array<i64: 4, 8>}, {pipeline_mode = #tpu.pipeline_mode<synchronous>, transform_indices = @transform_3, window_bounds = array<i64: 4, 1>}, {transform_indices = @transform_4, window_bounds = array<i64: 1>}, {transform_indices = @transform_5, window_bounds = array<i64: 1, 4, 256>}]} {
    %c0 = arith.constant 0 : index
    %c0_0 = arith.constant 0 : index
    %c0_1 = arith.constant 0 : index
    %0 = vector.load %arg2[%c0, %c0_0, %c0_1] : memref<1x36x256xf32, #tpu.memory_space<vmem>>, vector<1x36x256xf32>
    %1 = vector.shape_cast %0 : vector<1x36x256xf32> to vector<36x256xf32>
    %c0_2 = arith.constant 0 : index
    %c0_3 = arith.constant 0 : index
    %2 = vector.load %arg3[%c0_2, %c0_3] : memref<8x36xf32, #tpu.memory_space<vmem>>, vector<8x36xf32>
    %cst = arith.constant dense<0.000000e+00> : vector<8x256xf32>
    %3 = tpu.matmul %2, %1, %cst {dimension_numbers = #tpu.dot_dimension_numbers<[1], [0], [0], [1], [0, 0, 1, 1], [], []>} : vector<8x36xf32>, vector<36x256xf32>, vector<8x256xf32> -> vector<8x256xf32>
    %c0_4 = arith.constant 0 : index
    %c0_5 = arith.constant 0 : index
    %4 = vector.load %arg4[%c0_4, %c0_5] : memref<4x8xf32, #tpu.memory_space<vmem>>, vector<4x8xf32>
    %cst_6 = arith.constant dense<0.000000e+00> : vector<4x256xf32>
    %5 = tpu.matmul %4, %3, %cst_6 {dimension_numbers = #tpu.dot_dimension_numbers<[1], [0], [0], [1], [0, 0, 1, 1], [], []>} : vector<4x8xf32>, vector<8x256xf32>, vector<4x256xf32> -> vector<4x256xf32>
    %c0_7 = arith.constant 0 : index
    %c0_8 = arith.constant 0 : index
    %6 = vector.load %arg5[%c0_7, %c0_8] : memref<4x1xf32, #tpu.memory_space<vmem>>, vector<4x1xf32>
    %7 = vector.broadcast %6 : vector<4x1xf32> to vector<4x256xf32>
    %8 = arith.addf %5, %7 : vector<4x256xf32>
    %c0_9 = arith.constant 0 : index
    %9 = memref.load %arg6[%c0_9] : memref<1xf32, #tpu.memory_space<smem>>
    %cst_10 = arith.constant 0.000000e+00 : f32
    %10 = vector.broadcast %cst_10 : f32 to vector<4x256xf32>
    %11 = arith.cmpf oge, %8, %10 : vector<4x256xf32>
    %12 = vector.broadcast %9 : f32 to vector<4x256xf32>
    %13 = arith.mulf %12, %8 : vector<4x256xf32>
    %14 = arith.select %11, %8, %13 : vector<4x256xi1>, vector<4x256xf32>
    %c0_11 = arith.constant 0 : index
    %c0_12 = arith.constant 0 : index
    %c0_13 = arith.constant 0 : index
    %15 = vector.load %arg7[%c0_11, %c0_12, %c0_13] : memref<1x4x256xf32, #tpu.memory_space<vmem>>, vector<1x4x256xf32>
    %16 = vector.shape_cast %15 : vector<1x4x256xf32> to vector<4x256xf32>
    %17 = vector.shape_cast %14 : vector<4x256xf32> to vector<1x4x256xf32>
    tpu.vector_store %arg7[%c0_11, %c0_12, %c0_13], %17 {strides = array<i32>} : memref<1x4x256xf32, #tpu.memory_space<vmem>>, vector<1x4x256xf32>,
    return
  }
  func.func @transform_0(%arg0: i32, %arg1: i32) -> (i32, i32, i32) {
    %c0_i32 = arith.constant 0 : i32
    %c0_i32_0 = arith.constant 0 : i32
    return %arg0, %c0_i32, %arg1 : i32, i32, i32
  }
  func.func @transform_1(%arg0: i32, %arg1: i32) -> (i32, i32) {
    %c0_i32 = arith.constant 0 : i32
    %c0_i32_0 = arith.constant 0 : i32
    %c0_i32_1 = arith.constant 0 : i32
    return %c0_i32, %c0_i32_0 : i32, i32
  }
  func.func @transform_2(%arg0: i32, %arg1: i32) -> (i32, i32) {
    %c0_i32 = arith.constant 0 : i32
    %c0_i32_0 = arith.constant 0 : i32
    %c0_i32_1 = arith.constant 0 : i32
    return %c0_i32, %c0_i32_0 : i32, i32
  }
  func.func @transform_3(%arg0: i32, %arg1: i32) -> (i32, i32) {
    %c0_i32 = arith.constant 0 : i32
    %c0_i32_0 = arith.constant 0 : i32
    %c0_i32_1 = arith.constant 0 : i32
    return %c0_i32, %c0_i32_0 : i32, i32
  }
  func.func @transform_4(%arg0: i32, %arg1: i32) -> i32 {
    %c0_i32 = arith.constant 0 : i32
    %c0_i32_0 = arith.constant 0 : i32
    return %c0_i32 : i32
  }
  func.func @transform_5(%arg0: i32, %arg1: i32) -> (i32, i32, i32) {
    %c0_i32 = arith.constant 0 : i32
    %c0_i32_0 = arith.constant 0 : i32
    return %arg0, %c0_i32, %arg1 : i32, i32, i32
  }
}

</mosaic_0001>

<llo_original>
// kernel: tpu_custom_call.1
$region0: #{tpu_custom_call.1}
  #allocation0 [shape = 'u32[]', space=smem, size = 0x4, offset = 0x4, fixed_abs, tag = 'smem constant byte address 0x4 - core index']
  #allocation1 [shape = 'u32[72,128]{1,0:T(1,128)}', space=vmem, size = 0x9000, scoped, tag = 'internal scratch']
  #allocation2 [shape = 'f32[1]{0:T(128)S(6)}', space=smem, size = 0x200, scoped, tag = 'scoped memory for tpu_custom_call.1']
  %s0 = inlined_call_operand.vmem [shape: f32[2,36,256], index: 0, kind: input, shape index: {}]
  %s1 = inlined_call_operand.vmem [shape: f32[8,36], index: 1, kind: input, shape index: {}]
  %s2 = inlined_call_operand.vmem [shape: f32[4,8], index: 2, kind: input, shape index: {}]
  %s3 = inlined_call_operand.vmem [shape: f32[4,1], index: 3, kind: input, shape index: {}]
  %s4 = inlined_call_operand.<no memory space> [shape: f32[1], index: 4, kind: input, shape index: {}]
  %s5 = inlined_call_operand.hbm [shape: f32[2,4,256], index: 5, kind: output, shape index: {}]
  %s6 = sld [smem:[#allocation0]]
  $region53: #{tpu_custom_call.1} parent=0
    _
  %s8 = ssub.s32 1, %s6
  %s9 = scalar_select 0, %s8, %s6
  %10 = sst [smem:[#allocation2]] %s4
  $region1: #{tpu_custom_call.1} parent=0
    #allocation3 [shape = 'u8[8192]{0}', space=vmem, size = 0x2000, scoped, tag = 'output window, operand 0']
    #allocation4 [shape = 's32[2]{0}', space=sflag, size = 0x8, scoped, tag = 'scoped memory for tpu_custom_call.1']
    %11 = vsyncpa [#allocation4], 0
    %s12 = scalar_lea.sflag [#allocation4], 1
    %13 = vsyncpa %s12, 0
    loop: start=0, step=1, limit=4
    $region2: #{tpu_custom_call.1} parent=1 // loop_pre_header
      _
    $region3: #{tpu_custom_call.1} parent=1 // loop_header
      %s15 = sphi 0, %s19
      %p16 = scmp.ge.s32.totalorder %s15, 4
      %s22 = sphi 0, %s34
      %s23 = sphi 0, %s30
      %s24 = sphi 0, %s22
      %s25 = sphi 0, %s23
      %s26 = sphi 0, %s24
      %s27 = sphi 0, %s25
      %s39 = sphi 0, %s41
      %s42 = sphi 0, %s39
      %s43 = sphi 0, %s42
      %s59 = sphi 0, %s43
      %s63 = sphi 0, %s63
      %s65 = sphi 0, %s63
      %s66 = sphi 0, %s65
      %s80 = sphi 0, %s66
      %s84 = sphi 0, %s84
      %s86 = sphi 0, %s84
      %s87 = sphi 0, %s86
      %s101 = sphi 0, %s87
      %s105 = sphi 0, %s105
      %s107 = sphi 0, %s105
      %s108 = sphi 0, %s107
      %s122 = sphi 0, %s108
      %s126 = sphi 0, %s126
      %s128 = sphi 0, %s126
      %s129 = sphi 0, %s128
      %s143 = sphi 0, %s129
      %s151 = sphi 0, %s153
      %s154 = sphi 0, %s151
      %s155 = sphi 0, %s154
      %s171 = sphi 0, %s155
    $region4: #{tpu_custom_call.1} parent=1 // loop_header_branch
      %18 = sbr.rel (%p16) target = $region8
    $region5: #{tpu_custom_call.1} parent=1 // loop_body
      %s20 = ssub.s32 %s15, 1
      %s21 = ssub.s32 %s15, 2
      %s28 = sadd.s32 1, %s23
      %p29 = scmp.ge.s32.totalorder %s28, 1
      %s30 = scalar_select %p29, 0, %s28
      %s31 = sadd.s32 1, %s22
      %s32 = scalar_select %p29, %s31, %s22
      %p33 = scmp.ge.s32.totalorder %s32, 2
      %s34 = scalar_select %p33, 0, %s32
      %s35 = ssub.s32 %s22, %s34
      %s36 = ssub.s32 %s23, %s30
      %s37 = sor.u32 %s35, %s36
      %p38 = scmp.eq.s32.totalorder %s37, 0
      %s40 = sadd.s32 %s39, 1
      %s41 = scalar_select %p38, %s39, %s40
      %p44 = pneg %p38
      %p45 = scmp.eq.s32.totalorder %s15, 1
      %p46 = por %p44, %p45
      %p47 = scmp.ne.s32.totalorder %s39, %s42
      %p48 = scmp.eq.s32.totalorder %s15, 0
      %p49 = por %p47, %p48
      %p50 = scmp.ne.s32.totalorder %s39, %s42
      %p51 = scmp.eq.s32.totalorder %s20, 1
      %p52 = por %p50, %p51
      %p53 = scmp.ne.s32.totalorder %s42, %s43
      %p54 = scmp.eq.s32.totalorder %s20, 0
      %p55 = por %p53, %p54
      %p56 = scmp.ne.s32.totalorder %s42, %s43
      %p57 = scmp.eq.s32.totalorder %s21, 1
      %p58 = por %p56, %p57
      %p60 = scmp.ne.s32.totalorder %s43, %s59
      %p61 = scmp.eq.s32.totalorder %s21, 0
      %p62 = por %p60, %p61
      %s64 = sadd.s32 %s63, 1
      %p67 = scmp.eq.s32.totalorder %s15, 1
      %p68 = scmp.ne.s32.totalorder %s63, %s65
      %p69 = scmp.eq.s32.totalorder %s15, 0
      %p70 = por %p68, %p69
      %p71 = scmp.ne.s32.totalorder %s63, %s65
      %p72 = scmp.eq.s32.totalorder %s20, 1
      %p73 = por %p71, %p72
      %p74 = scmp.ne.s32.totalorder %s65, %s66
      %p75 = scmp.eq.s32.totalorder %s20, 0
      %p76 = por %p74, %p75
      %p77 = scmp.ne.s32.totalorder %s65, %s66
      %p78 = scmp.eq.s32.totalorder %s21, 1
      %p79 = por %p77, %p78
      %p81 = scmp.ne.s32.totalorder %s66, %s80
      %p82 = scmp.eq.s32.totalorder %s21, 0
      %p83 = por %p81, %p82
      %s85 = sadd.s32 %s84, 1
      %p88 = scmp.eq.s32.totalorder %s15, 1
      %p89 = scmp.ne.s32.totalorder %s84, %s86
      %p90 = scmp.eq.s32.totalorder %s15, 0
      %p91 = por %p89, %p90
      %p92 = scmp.ne.s32.totalorder %s84, %s86
      %p93 = scmp.eq.s32.totalorder %s20, 1
      %p94 = por %p92, %p93
      %p95 = scmp.ne.s32.totalorder %s86, %s87
      %p96 = scmp.eq.s32.totalorder %s20, 0
      %p97 = por %p95, %p96
      %p98 = scmp.ne.s32.totalorder %s86, %s87
      %p99 = scmp.eq.s32.totalorder %s21, 1
      %p100 = por %p98, %p99
      %p102 = scmp.ne.s32.totalorder %s87, %s101
      %p103 = scmp.eq.s32.totalorder %s21, 0
      %p104 = por %p102, %p103
      %s106 = sadd.s32 %s105, 1
      %p109 = scmp.eq.s32.totalorder %s15, 1
      %p110 = scmp.ne.s32.totalorder %s105, %s107
      %p111 = scmp.eq.s32.totalorder %s15, 0
      %p112 = por %p110, %p111
      %p113 = scmp.ne.s32.totalorder %s105, %s107
      %p114 = scmp.eq.s32.totalorder %s20, 1
      %p115 = por %p113, %p114
      %p116 = scmp.ne.s32.totalorder %s107, %s108
      %p117 = scmp.eq.s32.totalorder %s20, 0
      %p118 = por %p116, %p117
      %p119 = scmp.ne.s32.totalorder %s107, %s108
      %p120 = scmp.eq.s32.totalorder %s21, 1
      %p121 = por %p119, %p120
      %p123 = scmp.ne.s32.totalorder %s108, %s122
      %p124 = scmp.eq.s32.totalorder %s21, 0
      %p125 = por %p123, %p124
      %s127 = sadd.s32 %s126, 1
      %p130 = scmp.eq.s32.totalorder %s15, 1
      %p131 = scmp.ne.s32.totalorder %s126, %s128
      %p132 = scmp.eq.s32.totalorder %s15, 0
      %p133 = por %p131, %p132
      %p134 = scmp.ne.s32.totalorder %s126, %s128
      %p135 = scmp.eq.s32.totalorder %s20, 1
      %p136 = por %p134, %p135
      %p137 = scmp.ne.s32.totalorder %s128, %s129
      %p138 = scmp.eq.s32.totalorder %s20, 0
      %p139 = por %p137, %p138
      %p140 = scmp.ne.s32.totalorder %s128, %s129
      %p141 = scmp.eq.s32.totalorder %s21, 1
      %p142 = por %p140, %p141
      %p144 = scmp.ne.s32.totalorder %s129, %s143
      %p145 = scmp.eq.s32.totalorder %s21, 0
      %p146 = por %p144, %p145
      %s147 = ssub.s32 %s22, %s34
      %s148 = ssub.s32 %s23, %s30
      %s149 = sor.u32 %s147, %s148
      %p150 = scmp.eq.s32.totalorder %s149, 0
      %s152 = sadd.s32 %s151, 1
      %s153 = scalar_select %p150, %s151, %s152
      %p156 = pneg %p150
      %p157 = scmp.eq.s32.totalorder %s15, 1
      %p158 = por %p156, %p157
      %p159 = scmp.ne.s32.totalorder %s151, %s154
      %p160 = scmp.eq.s32.totalorder %s15, 0
      %p161 = por %p159, %p160
      %p162 = scmp.ne.s32.totalorder %s151, %s154
      %p163 = scmp.eq.s32.totalorder %s20, 1
      %p164 = por %p162, %p163
      %p165 = scmp.ne.s32.totalorder %s154, %s155
      %p166 = scmp.eq.s32.totalorder %s20, 0
      %p167 = por %p165, %p166
      %p168 = scmp.ne.s32.totalorder %s154, %s155
      %p169 = scmp.eq.s32.totalorder %s21, 1
      %p170 = por %p168, %p169
      %p172 = scmp.ne.s32.totalorder %s155, %s171
      %p173 = scmp.eq.s32.totalorder %s21, 0
      %p174 = por %p172, %p173
      %p175 = scmp.le.s32.totalorder 1, %s15
      %p176 = scmp.lt.s32.totalorder %s15, 3
      %p177 = pnand %p175, %p176
      %p178 = pneg %p177
      // Predicated region
      $region9: #{tpu_custom_call.1} parent=5 // pred_check
        _
      $region10: #{tpu_custom_call.1} parent=5 // pred_check_branch
        %180 = sbr.rel (%p177) target = $region12
      $region11: #{tpu_custom_call.1} parent=5 // pred_region
        %s181 = ssub.s32 %s15, 1
        // Predicated region
        $region13: #{tpu_custom_call.1} parent=11 // pred_check
          %p182 = pneg %p76
        $region14: #{tpu_custom_call.1} parent=11 // pred_check_branch
          %184 = sbr.rel (%p182) target = $region16
        $region15: #{tpu_custom_call.1} parent=11 // pred_region
          _
        $region16: #{tpu_custom_call.1} parent=11 // pred_fallthru
          _
        // Predicated region
        $region17: #{tpu_custom_call.1} parent=11 // pred_check
          %p185 = pneg %p97
        $region18: #{tpu_custom_call.1} parent=11 // pred_check_branch
          %187 = sbr.rel (%p185) target = $region20
        $region19: #{tpu_custom_call.1} parent=11 // pred_region
          _
        $region20: #{tpu_custom_call.1} parent=11 // pred_fallthru
          _
        // Predicated region
        $region21: #{tpu_custom_call.1} parent=11 // pred_check
          %p188 = pneg %p118
        $region22: #{tpu_custom_call.1} parent=11 // pred_check_branch
          %190 = sbr.rel (%p188) target = $region24
        $region23: #{tpu_custom_call.1} parent=11 // pred_region
          _
        $region24: #{tpu_custom_call.1} parent=11 // pred_fallthru
          _
        // Predicated region
        $region25: #{tpu_custom_call.1} parent=11 // pred_check
          %p191 = pneg %p139
        $region26: #{tpu_custom_call.1} parent=11 // pred_check_branch
          %193 = sbr.rel (%p191) target = $region28
        $region27: #{tpu_custom_call.1} parent=11 // pred_region
          _
        $region28: #{tpu_custom_call.1} parent=11 // pred_fallthru
          _
      $region12: #{tpu_custom_call.1} parent=5 // pred_fallthru
        _
      %p194 = scmp.lt.s32.totalorder %s15, 2
      // Predicated region
      $region29: #{tpu_custom_call.1} parent=5 // pred_check
        %p195 = pneg %p194
      $region30: #{tpu_custom_call.1} parent=5 // pred_check_branch
        %197 = sbr.rel (%p195) target = $region32
      $region31: #{tpu_custom_call.1} parent=5 // pred_region
        // Predicated region
        $region33: #{tpu_custom_call.1} parent=31 // pred_check
          %p198 = pneg %p49
        $region34: #{tpu_custom_call.1} parent=31 // pred_check_branch
          %200 = sbr.rel (%p198) target = $region36
        $region35: #{tpu_custom_call.1} parent=31 // pred_region
          %s201 = smul.u32 2, %s23
          %p202 = scmp.lt.s32.totalorder %s22, 1
          %s203 = scalar_select %p202, %s22, 1
          %p204 = scmp.lt.s32.totalorder %s201, 1
          %s205 = scalar_select %p204, %s201, 1
          %s206 = smul.addr %s203, 10
          %s207 = sadd.s32 %s205, %s206
          %s208 = smul.addr %s207, 8
          %s209 = scalar_lea.vmem %s0, %s208
          %s210 = smul.u32 2, %s23
        $region36: #{tpu_custom_call.1} parent=31 // pred_fallthru
          _
      $region32: #{tpu_custom_call.1} parent=5 // pred_fallthru
        _
      %p211 = scmp.le.s32.totalorder 1, %s15
      %p212 = scmp.lt.s32.totalorder %s15, 3
      %p213 = pnand %p211, %p212
      %p214 = pneg %p213
      // Predicated region
      $region37: #{tpu_custom_call.1} parent=5 // pred_check
        _
      $region38: #{tpu_custom_call.1} parent=5 // pred_check_branch
        %216 = sbr.rel (%p213) target = $region40
      $region39: #{tpu_custom_call.1} parent=5 // pred_region
        %s217 = ssub.s32 %s15, 1
        %s218 = smul.u32 2, %s25
        %p219 = scmp.lt.s32.totalorder %s24, 1
        %s220 = scalar_select %p219, %s24, 1
        %p221 = scmp.lt.s32.totalorder %s218, 1
        %s222 = scalar_select %p221, %s218, 1
        %s223 = smul.addr %s220, 10
        %s224 = sadd.s32 %s222, %s223
        %s225 = smul.addr %s224, 8
        %s226 = scalar_lea.vmem %s0, %s225
        %p227 = pneg %p55
        %p228 = pneg %p52
        %p229 = pneg %p76
        %p230 = pneg %p73
        %p231 = pneg %p97
        %p232 = pneg %p94
        %p233 = pneg %p118
        %p234 = pneg %p115
        %p235 = pneg %p139
        %p236 = pneg %p136
        %p237 = pneg %p167
        %p238 = pneg %p164
        %s239 = sand.u32 %s154, 1
        %s240 = scalar_lea.sflag [#allocation4], %s239
        %s241 = sand.u32 %s154, 1
        %s242 = smul.addr %s241, 8
        %s243 = scalar_lea.vmem [#allocation3], %s242
        %s244 = smul.u32 2, %s25
        %p245 = scmp.lt.s32.totalorder %s24, 1
        %s246 = scalar_select %p245, %s24, 1
        %p247 = scmp.lt.s32.totalorder %s244, 1
        %s248 = scalar_select %p247, %s244, 1
        %s249 = smul.addr %s246, 10
        %s250 = sadd.s32 %s248, %s249
        %s251 = smul.addr %s250, 8
        %s252 = scalar_lea.vmem %s0, %s251
        %s253 = smul.u32 2, %s25
        %s254 = smul.u32 2, %s25
        %v255 = vld [vmem:[%s252] sm:$0xff]
        %v256 = vld [vmem:[%s252 + $0x8] sm:$0xff]
        %v257 = vld [vmem:[%s252 + $0x10] sm:$0xff]
        %v258 = vld [vmem:[%s252 + $0x18] sm:$0xff]
        %v259 = vld [vmem:[%s252 + $0x20] sm:$0xff]
        %v260 = vld [vmem:[%s252 + $0x28] sm:$0xff]
        %v261 = vld [vmem:[%s252 + $0x30] sm:$0xff]
        %v262 = vld [vmem:[%s252 + $0x38] sm:$0xff]
        %v263 = vld [vmem:[%s252 + $0x40] sm:$0xf]
        %v264 = vld [vmem:[%s252 + $0x48] sm:$0xf]
        %v265 = vld [vmem:[%s1] sm:$0xff]
        %vm266 = vcmask 293888
        %v268 = vsel %vm266, %v265, 0
        %vm270 = vcmask 1043456
        %v272 = vsel %vm270, %v263, 0
        %v275 = vsel %vm270, %v264, 0
        %277 = vmatpush.msra.mxu0 0.0
        %278 = vmatpush.msra.mxu0 0.0
        %279 = vmatpush.msra.mxu0 0.0
        %280 = vmatpush.msra.mxu0 0.0
        %281 = vmatpush.msra.mxu0 0.0
        %282 = vmatpush.msra.mxu0 0.0
        %283 = vmatpush.msra.mxu0 0.0
        %284 = vmatpush.msra.mxu0 0.0
        %285 = vmatpush.msra.mxu0 0.0
        %286 = vmatpush.msra.mxu0 0.0
        %287 = vmatpush.msra.mxu0 0.0
        %288 = vmatpush.msra.mxu0 %v272
        %289 = vmatpush.msra.mxu0 %v261
        %290 = vmatpush.msra.mxu0 %v259
        %291 = vmatpush.msra.mxu0 %v257
        %292 = vmatpush.msra.mxu0 %v255
        %293 = vmatmul.f32.gmra.mxu0 %v268
        %v294 = vpop.f32.mrf.mxu0
        %v295 = vadd.f32 0.0, %v294
        %296 = vdwg.mxu0
        %297 = vmatpush.msra.mxu0 0.0
        %298 = vmatpush.msra.mxu0 0.0
        %299 = vmatpush.msra.mxu0 0.0
        %300 = vmatpush.msra.mxu0 0.0
        %301 = vmatpush.msra.mxu0 0.0
        %302 = vmatpush.msra.mxu0 0.0
        %303 = vmatpush.msra.mxu0 0.0
        %304 = vmatpush.msra.mxu0 0.0
        %305 = vmatpush.msra.mxu0 0.0
        %306 = vmatpush.msra.mxu0 0.0
        %307 = vmatpush.msra.mxu0 0.0
        %308 = vmatpush.msra.mxu0 %v275
        %309 = vmatpush.msra.mxu0 %v262
        %310 = vmatpush.msra.mxu0 %v260
        %311 = vmatpush.msra.mxu0 %v258
        %312 = vmatpush.msra.mxu0 %v256
        %313 = vmatmul.f32.gmra.mxu0 %v268
        %v314 = vpop.f32.mrf.mxu0
        %v315 = vadd.f32 0.0, %v314
        %316 = vdwg.mxu0
        %v317 = vld [vmem:[%s2] sm:$0xf]
        %v318 = vld [vmem:[%s3] sm:$0xf]
        %320 = vset.pattern.permute.xlu0 0
        %321 = vperm.xlu0 %320, %v318
        %v322 = vpop.permute.xlu0 %321
        %vm324 = vcmask 64512
        %v326 = vsel %vm324, %v317, 0
        %328 = vmatpush.msra.mxu0 0.0
        %329 = vmatpush.msra.mxu0 0.0
        %330 = vmatpush.msra.mxu0 0.0
        %331 = vmatpush.msra.mxu0 0.0
        %332 = vmatpush.msra.mxu0 0.0
        %333 = vmatpush.msra.mxu0 0.0
        %334 = vmatpush.msra.mxu0 0.0
        %335 = vmatpush.msra.mxu0 0.0
        %336 = vmatpush.msra.mxu0 0.0
        %337 = vmatpush.msra.mxu0 0.0
        %338 = vmatpush.msra.mxu0 0.0
        %339 = vmatpush.msra.mxu0 0.0
        %340 = vmatpush.msra.mxu0 0.0
        %341 = vmatpush.msra.mxu0 0.0
        %342 = vmatpush.msra.mxu0 0.0
        %343 = vmatpush.msra.mxu0 %v295
        %344 = vmatmul.f32.gmra.mxu0 %v326
        %v345 = vpop.f32.mrf.mxu0
        %v346 = vadd.f32 %v322, %v345
        %347 = vdwg.mxu0
        %348 = vmatpush.msra.mxu0 0.0
        %349 = vmatpush.msra.mxu0 0.0
        %350 = vmatpush.msra.mxu0 0.0
        %351 = vmatpush.msra.mxu0 0.0
        %352 = vmatpush.msra.mxu0 0.0
        %353 = vmatpush.msra.mxu0 0.0
        %354 = vmatpush.msra.mxu0 0.0
        %355 = vmatpush.msra.mxu0 0.0
        %356 = vmatpush.msra.mxu0 0.0
        %357 = vmatpush.msra.mxu0 0.0
        %358 = vmatpush.msra.mxu0 0.0
        %359 = vmatpush.msra.mxu0 0.0
        %360 = vmatpush.msra.mxu0 0.0
        %361 = vmatpush.msra.mxu0 0.0
        %362 = vmatpush.msra.mxu0 0.0
        %363 = vmatpush.msra.mxu0 %v315
        %364 = vmatmul.f32.gmra.mxu0 %v326
        %v365 = vpop.f32.mrf.mxu0
        %v366 = vadd.f32 %v322, %v365
        %367 = vdwg.mxu0
        %s368 = sld [smem:[#allocation2]]
        %vm369 = vcmp.ge.f32.partialorder %v346, 0.0
        %vm370 = vcmp.ge.f32.partialorder %v366, 0.0
        %v371 = vstv %s368
        %v372 = vmul.f32 %v371, %v346
        %v373 = vmul.f32 %v371, %v366
        %v374 = vsel %vm369, %v346, %v372
        %v375 = vsel %vm370, %v366, %v373
        %v378 = vrot.slane %v375, 4
        %v379 = vsel %vm270, %v374, %v378
        %381 = vst [vmem:[%s243] sm:$0xff] %v379
        %s382 = sand.u32 %s154, 1
        %s383 = scalar_lea.sflag [#allocation4], %s382
        %s384 = sand.u32 %s154, 1
        %s385 = smul.addr %s384, 8
        %s386 = scalar_lea.vmem [#allocation3], %s385
        // Predicated region
        $region41: #{tpu_custom_call.1} parent=39 // pred_check
          %p387 = pneg %p164
        $region42: #{tpu_custom_call.1} parent=39 // pred_check_branch
          %389 = sbr.rel (%p387) target = $region44
        $region43: #{tpu_custom_call.1} parent=39 // pred_region
          %s390 = smul.u32 2, %s25
          %392 = vsyncadd %s383, 0
          %s393 = smul.addr %s24, 2
          %s394 = sadd.s32 %s390, %s393
          %s395 = smul.addr %s394, 4
          %s396 = scalar_lea.hbm %s5, %s395
          %s398 = sshll.u32 %s386, 4
          %s399 = int_to_ptr.vmem [resolvable:$true] %s398
          %s400 = sshll.u32 %s396, 4
          %s401 = int_to_ptr.hbm [resolvable:$true] %s400
          %403 = dma.vmem_to_hbm [thread:$0]  %s399, 128, %s401, %s383
        $region44: #{tpu_custom_call.1} parent=39 // pred_fallthru
          _
      $region40: #{tpu_custom_call.1} parent=5 // pred_fallthru
        _
      %p404 = scmp.le.s32.totalorder 2, %s15
      // Predicated region
      $region45: #{tpu_custom_call.1} parent=5 // pred_check
        %p405 = pneg %p404
      $region46: #{tpu_custom_call.1} parent=5 // pred_check_branch
        %407 = sbr.rel (%p405) target = $region48
      $region47: #{tpu_custom_call.1} parent=5 // pred_region
        %s408 = ssub.s32 %s15, 2
        // Predicated region
        $region49: #{tpu_custom_call.1} parent=47 // pred_check
          %p409 = pneg %p170
        $region50: #{tpu_custom_call.1} parent=47 // pred_check_branch
          %411 = sbr.rel (%p409) target = $region52
        $region51: #{tpu_custom_call.1} parent=47 // pred_region
          %s412 = sand.u32 %s155, 1
          %s413 = scalar_lea.sflag [#allocation4], %s412
          %s414 = sand.u32 %s155, 1
          %s415 = smul.addr %s414, 8
          %s416 = scalar_lea.vmem [#allocation3], %s415
          %418 = dma.done %s413, 128
        $region52: #{tpu_custom_call.1} parent=47 // pred_fallthru
          _
      $region48: #{tpu_custom_call.1} parent=5 // pred_fallthru
        _
    $region6: #{tpu_custom_call.1} parent=1 // loop_footer
      %s19 = sadd.s32 1, %s15
    $region7: #{tpu_custom_call.1} parent=1 // loop_footer_branch
      %14 = sbr.rel target = $region3
    $region8: #{tpu_custom_call.1} parent=1 // loop_exit
      _
    %419 = vsyncpa [#allocation4], 1
    %s420 = scalar_lea.sflag [#allocation4], 1
    %421 = vsyncpa %s420, 1

</llo_original>
